<compile_context>
chip_gen: v5e
topology: v5e:2x2
jax: 0.10.0
libtpu: 0.0.40
codegen_flags: <defaults>
</compile_context>

<pallas_src>
import jax
import jax.numpy as jnp
from jax.experimental import pallas as pl
from jax.experimental.pallas import tpu as pltpu


def attn_gate_kernel(gate_ref, skip_ref, wg_ref, ws_ref, bcomb_ref, wa_ref,
                     ba_ref, out_ref):
    # gate_ref: (Cg, T)  skip_ref: (Cs, T)       (pixels on lanes)
    # wg: (Ci, Cg)  ws: (Ci, Cs)   in the input dtype (MXU consumes natively)
    # bcomb: (Ci, 1) f32 = bg + bs   wa: (Ci, 1) f32   ba: (1,) f32 in SMEM
    # out_ref: (Cs, T)
    gate = gate_ref[...]
    skip = skip_ref[...]

    g = jnp.dot(wg_ref[...], gate, preferred_element_type=jnp.float32)
    s = jnp.dot(ws_ref[...], skip, preferred_element_type=jnp.float32)
    h = jnp.maximum(g + s + bcomb_ref[...], 0.0)                 # (Ci, T) f32

    # attention_conv (Ci -> 1): weighted sublane reduce + scalar bias.
    a = jnp.sum(h * wa_ref[...], axis=0, keepdims=True) + ba_ref[0]   # (1, T)
    attn = jax.nn.sigmoid(a)

    # Only the (1, T) attention row is cast; the (Cs, T) skip tile stays in its
    # original dtype (no full-tile VPU cast passes).
    out_ref[...] = skip * attn.astype(out_ref.dtype)             # (Cs, T)


def _pick_pixel_tile(HW, N, Cg, Cs, Ci, itemsize, vmem_budget_bytes):
    """Largest lane-dense pixel tile that fits the per-step VMEM budget."""
    # Per-pixel VMEM bytes: double-buffered gate/skip/out tiles plus ~4 live
    # f32 (Ci, T) intermediates (g, s, h, weighted h).
    per_pix = 2 * (Cg + 2 * Cs) * itemsize + 4 * Ci * 4
    t_cap = max(128, (vmem_budget_bytes // per_pix) // 128 * 128)
    if HW <= t_cap:
        t = HW
        # v7x megacore: when there is a single image, keep >= 2 grid steps so
        # both TensorCores get work.
        if N == 1 and HW >= 256:
            t = min(HW, ((pl.cdiv(HW, 2) + 127) // 128) * 128)
    else:
        t = t_cap
    return t


def attention_gate_ref(gate, skip, wg, bg, ws, bs, wa, ba):
    """Pure-JAX reference matching the PyTorch forward pass."""
    N, Cg, H, W = gate.shape
    Cs = skip.shape[1]
    gate_f = jnp.transpose(gate, (0, 2, 3, 1)).reshape(-1, Cg)
    skip_f = jnp.transpose(skip, (0, 2, 3, 1)).reshape(-1, Cs)
    g = gate_f @ wg + bg
    s = skip_f @ ws + bs
    a = jax.nn.sigmoid(jnp.maximum(g + s, 0.0) @ wa + ba)
    out_f = skip_f * a
    return jnp.transpose(out_f.reshape(N, H, W, Cs), (0, 3, 1, 2))


def attention_gate_pallas(gate, skip, wg, bg, ws, bs, wa, ba):
    """gate: (N, Cg, H, W)  skip: (N, Cs, H, W)  -> (N, Cs, H, W)   (NCHW)."""
    N, Cg, H, W = gate.shape
    Cs = skip.shape[1]
    Ci = wg.shape[1]
    HW = H * W

    # Small-problem fallback: nothing to win from the kernel path.
    if HW < 128:
        return attention_gate_ref(gate, skip, wg, bg, ws, bs, wa, ba)

    # Free reshapes: channel-major, pixels contiguous on the last axis.
    gate_r = gate.reshape(N, Cg, HW)
    skip_r = skip.reshape(N, Cs, HW)

    itemsize = jnp.dtype(skip.dtype).itemsize
    VMEM_BUDGET = 24 << 20        # comfortable on v7x (64 MiB physical VMEM)
    VMEM_LIMIT = 48 << 20         # raise scoped VMEM (v5e default is 16 MiB)
    t = _pick_pixel_tile(HW, N, Cg, Cs, Ci, itemsize, VMEM_BUDGET)
    n_pix = pl.cdiv(HW, t)        # ragged tail handled by masked partial blocks

    # Tiny parameter tensors.  Weights in the input dtype (MXU takes them
    # natively -> no full-tile upcast in the kernel); biases folded once.
    wg_t = wg.T.astype(gate.dtype)                        # (Ci, Cg)
    ws_t = ws.T.astype(skip.dtype)                        # (Ci, Cs)
    b_comb = (bg + bs).astype(jnp.float32).reshape(Ci, 1)  # (Ci, 1)
    wa_c = wa.astype(jnp.float32).reshape(Ci, 1)           # (Ci, 1)
    ba_s = ba.astype(jnp.float32).reshape(1)                # scalar in SMEM

    full = lambda shape: pl.BlockSpec(shape, lambda n, p: (0, 0))

    cost = pl.CostEstimate(
        flops=2 * N * HW * Ci * (Cg + Cs + 1),
        transcendentals=N * HW,                            # sigmoid
        bytes_accessed=(gate_r.size + 2 * skip_r.size) * itemsize,
    )

    out_r = pl.pallas_call(
        attn_gate_kernel,
        out_shape=jax.ShapeDtypeStruct((N, Cs, HW), skip.dtype),
        grid_spec=pltpu.PrefetchScalarGridSpec(
            num_scalar_prefetch=0,
            grid=(N, n_pix),
            in_specs=[
                pl.BlockSpec((None, Cg, t), lambda n, p: (n, 0, p)),  # gate tile
                pl.BlockSpec((None, Cs, t), lambda n, p: (n, 0, p)),  # skip tile
                full((Ci, Cg)),                                       # gate_conv W^T
                full((Ci, Cs)),                                       # skip_conv W^T
                full((Ci, 1)),                                        # folded bias
                full((Ci, 1)),                                        # attention_conv W
                pl.BlockSpec(memory_space=pltpu.MemorySpace.SMEM),    # attention_conv b
            ],
            out_specs=pl.BlockSpec((None, Cs, t), lambda n, p: (n, 0, p)),
        ),
        compiler_params=pltpu.CompilerParams(
            dimension_semantics=("parallel", "parallel"),
            vmem_limit_bytes=VMEM_LIMIT),
        cost_estimate=cost,
    )(gate_r, skip_r, wg_t, ws_t, b_comb, wa_c, ba_s)

    return out_r.reshape(N, Cs, H, W)


if __name__ == "__main__":
    # Small, deterministic setup.
    gate_channels, skip_channels, inter_channels = 4, 6, 8
    N, H, W = 2, 16, 16

    key = jax.random.PRNGKey(0)
    keys = jax.random.split(key, 8)

    gate = jax.random.normal(keys[0], (N, gate_channels, H, W), jnp.float32)
    skip = jax.random.normal(keys[1], (N, skip_channels, H, W), jnp.float32)

    # Parameters (PyTorch Conv2d 1x1 weight (out,in,1,1) ≡ matmul weight (in,out)).
    wg = 0.1 * jax.random.normal(keys[2], (gate_channels, inter_channels), jnp.float32)
    bg = 0.1 * jax.random.normal(keys[3], (1, inter_channels), jnp.float32)
    ws = 0.1 * jax.random.normal(keys[4], (skip_channels, inter_channels), jnp.float32)
    bs = 0.1 * jax.random.normal(keys[5], (1, inter_channels), jnp.float32)
    wa = 0.1 * jax.random.normal(keys[6], (inter_channels, 1), jnp.float32)
    ba = 0.1 * jax.random.normal(keys[7], (1, 1), jnp.float32)

    out = attention_gate_pallas(gate, skip, wg, bg, ws, bs, wa, ba)
    out = jax.block_until_ready(out)

    ref = attention_gate_ref(gate, skip, wg, bg, ws, bs, wa, ba)
    assert out.shape == (N, skip_channels, H, W)
    assert jnp.allclose(out, ref, atol=1e-4, rtol=1e-4)

    print("KERNEL_OK")
</pallas_src>

<mosaic_0001>
module attributes {stable_mosaic.version = 11 : i64} {
  func.func @attn_gate_kernel(%arg0: i32, %arg1: i32, %arg2: memref<1x4x256xf32, #tpu.memory_space<vmem>>, %arg3: memref<1x6x256xf32, #tpu.memory_space<vmem>>, %arg4: memref<8x4xf32, #tpu.memory_space<vmem>>, %arg5: memref<8x6xf32, #tpu.memory_space<vmem>>, %arg6: memref<8x1xf32, #tpu.memory_space<vmem>>, %arg7: memref<8x1xf32, #tpu.memory_space<vmem>>, %arg8: memref<1xf32, #tpu.memory_space<smem>>, %arg9: memref<1x6x256xf32, #tpu.memory_space<vmem>>) attributes {dimension_semantics = [#tpu.dimension_semantics<parallel>, #tpu.dimension_semantics<parallel>], iteration_bounds = array<i64: 2, 1>, scalar_prefetch = 0 : i64, scratch_operands = 0 : i64, tpu.core_type = #tpu.core_type<tc>, window_params = [{transform_indices = @transform_0, window_bounds = array<i64: 1, 4, 256>}, {transform_indices = @transform_1, window_bounds = array<i64: 1, 6, 256>}, {pipeline_mode = #tpu.pipeline_mode<synchronous>, transform_indices = @transform_2, window_bounds = array<i64: 8, 4>}, {pipeline_mode = #tpu.pipeline_mode<synchronous>, transform_indices = @transform_3, window_bounds = array<i64: 8, 6>}, {pipeline_mode = #tpu.pipeline_mode<synchronous>, transform_indices = @transform_4, window_bounds = array<i64: 8, 1>}, {pipeline_mode = #tpu.pipeline_mode<synchronous>, transform_indices = @transform_5, window_bounds = array<i64: 8, 1>}, {transform_indices = @transform_6, window_bounds = array<i64: 1>}, {transform_indices = @transform_7, window_bounds = array<i64: 1, 6, 256>}]} {
    %c0 = arith.constant 0 : index
    %c0_0 = arith.constant 0 : index
    %c0_1 = arith.constant 0 : index
    %0 = vector.load %arg2[%c0, %c0_0, %c0_1] : memref<1x4x256xf32, #tpu.memory_space<vmem>>, vector<1x4x256xf32>
    %1 = vector.shape_cast %0 : vector<1x4x256xf32> to vector<4x256xf32>
    %c0_2 = arith.constant 0 : index
    %c0_3 = arith.constant 0 : index
    %c0_4 = arith.constant 0 : index
    %2 = vector.load %arg3[%c0_2, %c0_3, %c0_4] : memref<1x6x256xf32, #tpu.memory_space<vmem>>, vector<1x6x256xf32>
    %3 = vector.shape_cast %2 : vector<1x6x256xf32> to vector<6x256xf32>
    %c0_5 = arith.constant 0 : index
    %c0_6 = arith.constant 0 : index
    %4 = vector.load %arg4[%c0_5, %c0_6] : memref<8x4xf32, #tpu.memory_space<vmem>>, vector<8x4xf32>
    %cst = arith.constant dense<0.000000e+00> : vector<8x256xf32>
    %5 = tpu.matmul %4, %1, %cst {dimension_numbers = #tpu.dot_dimension_numbers<[1], [0], [0], [1], [0, 0, 1, 1], [], []>} : vector<8x4xf32>, vector<4x256xf32>, vector<8x256xf32> -> vector<8x256xf32>
    %c0_7 = arith.constant 0 : index
    %c0_8 = arith.constant 0 : index
    %6 = vector.load %arg5[%c0_7, %c0_8] : memref<8x6xf32, #tpu.memory_space<vmem>>, vector<8x6xf32>
    %cst_9 = arith.constant dense<0.000000e+00> : vector<8x256xf32>
    %7 = tpu.matmul %6, %3, %cst_9 {dimension_numbers = #tpu.dot_dimension_numbers<[1], [0], [0], [1], [0, 0, 1, 1], [], []>} : vector<8x6xf32>, vector<6x256xf32>, vector<8x256xf32> -> vector<8x256xf32>
    %8 = arith.addf %5, %7 : vector<8x256xf32>
    %c0_10 = arith.constant 0 : index
    %c0_11 = arith.constant 0 : index
    %9 = vector.load %arg6[%c0_10, %c0_11] : memref<8x1xf32, #tpu.memory_space<vmem>>, vector<8x1xf32>
    %10 = vector.broadcast %9 : vector<8x1xf32> to vector<8x256xf32>
    %11 = arith.addf %8, %10 : vector<8x256xf32>
    %cst_12 = arith.constant 0.000000e+00 : f32
    %12 = vector.broadcast %cst_12 : f32 to vector<8x256xf32>
    %13 = arith.maximumf %11, %12 : vector<8x256xf32>
    %c0_13 = arith.constant 0 : index
    %c0_14 = arith.constant 0 : index
    %14 = vector.load %arg7[%c0_13, %c0_14] : memref<8x1xf32, #tpu.memory_space<vmem>>, vector<8x1xf32>
    %15 = vector.broadcast %14 : vector<8x1xf32> to vector<8x256xf32>
    %16 = arith.mulf %13, %15 : vector<8x256xf32>
    %cst_15 = arith.constant dense<0.000000e+00> : vector<256xf32>
    %17 = vector.multi_reduction <add>, %16, %cst_15 [0] : vector<8x256xf32> to vector<256xf32>
    %18 = vector.shape_cast %17 : vector<256xf32> to vector<1x256xf32>
    %c0_16 = arith.constant 0 : index
    %19 = memref.load %arg8[%c0_16] : memref<1xf32, #tpu.memory_space<smem>>
    %20 = vector.broadcast %19 : f32 to vector<1x256xf32>
    %21 = arith.addf %18, %20 : vector<1x256xf32>
    %22 = arith.negf %21 : vector<1x256xf32>
    %23 = math.exp %22 : vector<1x256xf32>
    %cst_17 = arith.constant 1.000000e+00 : f32
    %24 = vector.broadcast %cst_17 : f32 to vector<1x256xf32>
    %25 = arith.addf %24, %23 : vector<1x256xf32>
    %26 = arith.divf %24, %25 : vector<1x256xf32>
    %27 = vector.broadcast %26 : vector<1x256xf32> to vector<6x256xf32>
    %28 = arith.mulf %3, %27 : vector<6x256xf32>
    %c0_18 = arith.constant 0 : index
    %c0_19 = arith.constant 0 : index
    %c0_20 = arith.constant 0 : index
    %29 = vector.load %arg9[%c0_18, %c0_19, %c0_20] : memref<1x6x256xf32, #tpu.memory_space<vmem>>, vector<1x6x256xf32>
    %30 = vector.shape_cast %29 : vector<1x6x256xf32> to vector<6x256xf32>
    %31 = vector.shape_cast %28 : vector<6x256xf32> to vector<1x6x256xf32>
    tpu.vector_store %arg9[%c0_18, %c0_19, %c0_20], %31 {strides = array<i32>} : memref<1x6x256xf32, #tpu.memory_space<vmem>>, vector<1x6x256xf32>,
    return
  }
  func.func @transform_0(%arg0: i32, %arg1: i32) -> (i32, i32, i32) {
    %c0_i32 = arith.constant 0 : i32
    %c0_i32_0 = arith.constant 0 : i32
    return %arg0, %c0_i32, %arg1 : i32, i32, i32
  }
  func.func @transform_1(%arg0: i32, %arg1: i32) -> (i32, i32, i32) {
    %c0_i32 = arith.constant 0 : i32
    %c0_i32_0 = arith.constant 0 : i32
    return %arg0, %c0_i32, %arg1 : i32, i32, i32
  }
  func.func @transform_2(%arg0: i32, %arg1: i32) -> (i32, i32) {
    %c0_i32 = arith.constant 0 : i32
    %c0_i32_0 = arith.constant 0 : i32
    %c0_i32_1 = arith.constant 0 : i32
    return %c0_i32, %c0_i32_0 : i32, i32
  }
  func.func @transform_3(%arg0: i32, %arg1: i32) -> (i32, i32) {
    %c0_i32 = arith.constant 0 : i32
    %c0_i32_0 = arith.constant 0 : i32
    %c0_i32_1 = arith.constant 0 : i32
    return %c0_i32, %c0_i32_0 : i32, i32
  }
  func.func @transform_4(%arg0: i32, %arg1: i32) -> (i32, i32) {
    %c0_i32 = arith.constant 0 : i32
    %c0_i32_0 = arith.constant 0 : i32
    %c0_i32_1 = arith.constant 0 : i32
    return %c0_i32, %c0_i32_0 : i32, i32
  }
  func.func @transform_5(%arg0: i32, %arg1: i32) -> (i32, i32) {
    %c0_i32 = arith.constant 0 : i32
    %c0_i32_0 = arith.constant 0 : i32
    %c0_i32_1 = arith.constant 0 : i32
    return %c0_i32, %c0_i32_0 : i32, i32
  }
  func.func @transform_6(%arg0: i32, %arg1: i32) -> i32 {
    %c0_i32 = arith.constant 0 : i32
    %c0_i32_0 = arith.constant 0 : i32
    return %c0_i32 : i32
  }
  func.func @transform_7(%arg0: i32, %arg1: i32) -> (i32, i32, i32) {
    %c0_i32 = arith.constant 0 : i32
    %c0_i32_0 = arith.constant 0 : i32
    return %arg0, %c0_i32, %arg1 : i32, i32, i32
  }
}

</mosaic_0001>

<llo_original>
// kernel: tpu_custom_call.1
$region0: #{tpu_custom_call.1}
  #allocation0 [shape = 'u32[]', space=smem, size = 0x4, offset = 0x4, fixed_abs, tag = 'smem constant byte address 0x4 - core index']
  #allocation1 [shape = 'u32[72,128]{1,0:T(1,128)}', space=vmem, size = 0x9000, scoped, tag = 'internal scratch']
  #allocation2 [shape = 'f32[1]{0:T(128)S(6)}', space=smem, size = 0x200, scoped, tag = 'scoped memory for tpu_custom_call.1']
  %s0 = inlined_call_operand.vmem [shape: f32[2,4,256], index: 0, kind: input, shape index: {}]
  %s1 = inlined_call_operand.vmem [shape: f32[2,6,256], index: 1, kind: input, shape index: {}]
  %s2 = inlined_call_operand.vmem [shape: f32[8,4], index: 2, kind: input, shape index: {}]
  %s3 = inlined_call_operand.vmem [shape: f32[8,6], index: 3, kind: input, shape index: {}]
  %s4 = inlined_call_operand.vmem [shape: f32[8,1], index: 4, kind: input, shape index: {}]
  %s5 = inlined_call_operand.vmem [shape: f32[8,1], index: 5, kind: input, shape index: {}]
  %s6 = inlined_call_operand.<no memory space> [shape: f32[1], index: 6, kind: input, shape index: {}]
  %s7 = inlined_call_operand.vmem [shape: f32[2,6,256], index: 7, kind: output, shape index: {}]
  %s8 = sld [smem:[#allocation0]]
  $region61: #{tpu_custom_call.1} parent=0
    _
  %s10 = ssub.s32 1, %s8
  %s11 = scalar_select 0, %s10, %s8
  %12 = sst [smem:[#allocation2]] %s6
  loop: start=0, step=1, limit=4
  $region2: #{tpu_custom_call.1} parent=0 // loop_pre_header
    _
  $region3: #{tpu_custom_call.1} parent=0 // loop_header
    %s14 = sphi 0, %s18
    %p15 = scmp.ge.s32.totalorder %s14, 4
    %s21 = sphi 0, %s33
    %s22 = sphi 0, %s29
    %s23 = sphi 0, %s21
    %s24 = sphi 0, %s22
    %s25 = sphi 0, %s23
    %s26 = sphi 0, %s24
    %s38 = sphi 0, %s40
    %s41 = sphi 0, %s38
    %s42 = sphi 0, %s41
    %s58 = sphi 0, %s42
    %s66 = sphi 0, %s68
    %s69 = sphi 0, %s66
    %s70 = sphi 0, %s69
    %s86 = sphi 0, %s70
    %s90 = sphi 0, %s90
    %s92 = sphi 0, %s90
    %s93 = sphi 0, %s92
    %s107 = sphi 0, %s93
    %s111 = sphi 0, %s111
    %s113 = sphi 0, %s111
    %s114 = sphi 0, %s113
    %s128 = sphi 0, %s114
    %s132 = sphi 0, %s132
    %s134 = sphi 0, %s132
    %s135 = sphi 0, %s134
    %s149 = sphi 0, %s135
    %s153 = sphi 0, %s153
    %s155 = sphi 0, %s153
    %s156 = sphi 0, %s155
    %s170 = sphi 0, %s156
    %s174 = sphi 0, %s174
    %s176 = sphi 0, %s174
    %s177 = sphi 0, %s176
    %s191 = sphi 0, %s177
    %s199 = sphi 0, %s201
    %s202 = sphi 0, %s199
    %s203 = sphi 0, %s202
    %s219 = sphi 0, %s203
  $region4: #{tpu_custom_call.1} parent=0 // loop_header_branch
    %17 = sbr.rel (%p15) target = $region8
  $region5: #{tpu_custom_call.1} parent=0 // loop_body
    %s19 = ssub.s32 %s14, 1
    %s20 = ssub.s32 %s14, 2
    %s27 = sadd.s32 1, %s22
    %p28 = scmp.ge.s32.totalorder %s27, 1
    %s29 = scalar_select %p28, 0, %s27
    %s30 = sadd.s32 1, %s21
    %s31 = scalar_select %p28, %s30, %s21
    %p32 = scmp.ge.s32.totalorder %s31, 2
    %s33 = scalar_select %p32, 0, %s31
    %s34 = ssub.s32 %s21, %s33
    %s35 = ssub.s32 %s22, %s29
    %s36 = sor.u32 %s34, %s35
    %p37 = scmp.eq.s32.totalorder %s36, 0
    %s39 = sadd.s32 %s38, 1
    %s40 = scalar_select %p37, %s38, %s39
    %p43 = pneg %p37
    %p44 = scmp.eq.s32.totalorder %s14, 1
    %p45 = por %p43, %p44
    %p46 = scmp.ne.s32.totalorder %s38, %s41
    %p47 = scmp.eq.s32.totalorder %s14, 0
    %p48 = por %p46, %p47
    %p49 = scmp.ne.s32.totalorder %s38, %s41
    %p50 = scmp.eq.s32.totalorder %s19, 1
    %p51 = por %p49, %p50
    %p52 = scmp.ne.s32.totalorder %s41, %s42
    %p53 = scmp.eq.s32.totalorder %s19, 0
    %p54 = por %p52, %p53
    %p55 = scmp.ne.s32.totalorder %s41, %s42
    %p56 = scmp.eq.s32.totalorder %s20, 1
    %p57 = por %p55, %p56
    %p59 = scmp.ne.s32.totalorder %s42, %s58
    %p60 = scmp.eq.s32.totalorder %s20, 0
    %p61 = por %p59, %p60
    %s62 = ssub.s32 %s21, %s33
    %s63 = ssub.s32 %s22, %s29
    %s64 = sor.u32 %s62, %s63
    %p65 = scmp.eq.s32.totalorder %s64, 0
    %s67 = sadd.s32 %s66, 1
    %s68 = scalar_select %p65, %s66, %s67
    %p71 = pneg %p65
    %p72 = scmp.eq.s32.totalorder %s14, 1
    %p73 = por %p71, %p72
    %p74 = scmp.ne.s32.totalorder %s66, %s69
    %p75 = scmp.eq.s32.totalorder %s14, 0
    %p76 = por %p74, %p75
    %p77 = scmp.ne.s32.totalorder %s66, %s69
    %p78 = scmp.eq.s32.totalorder %s19, 1
    %p79 = por %p77, %p78
    %p80 = scmp.ne.s32.totalorder %s69, %s70
    %p81 = scmp.eq.s32.totalorder %s19, 0
    %p82 = por %p80, %p81
    %p83 = scmp.ne.s32.totalorder %s69, %s70
    %p84 = scmp.eq.s32.totalorder %s20, 1
    %p85 = por %p83, %p84
    %p87 = scmp.ne.s32.totalorder %s70, %s86
    %p88 = scmp.eq.s32.totalorder %s20, 0
    %p89 = por %p87, %p88
    %s91 = sadd.s32 %s90, 1
    %p94 = scmp.eq.s32.totalorder %s14, 1
    %p95 = scmp.ne.s32.totalorder %s90, %s92
    %p96 = scmp.eq.s32.totalorder %s14, 0
    %p97 = por %p95, %p96
    %p98 = scmp.ne.s32.totalorder %s90, %s92
    %p99 = scmp.eq.s32.totalorder %s19, 1
    %p100 = por %p98, %p99
    %p101 = scmp.ne.s32.totalorder %s92, %s93
    %p102 = scmp.eq.s32.totalorder %s19, 0
    %p103 = por %p101, %p102
    %p104 = scmp.ne.s32.totalorder %s92, %s93
    %p105 = scmp.eq.s32.totalorder %s20, 1
    %p106 = por %p104, %p105
    %p108 = scmp.ne.s32.totalorder %s93, %s107
    %p109 = scmp.eq.s32.totalorder %s20, 0
    %p110 = por %p108, %p109
    %s112 = sadd.s32 %s111, 1
    %p115 = scmp.eq.s32.totalorder %s14, 1
    %p116 = scmp.ne.s32.totalorder %s111, %s113
    %p117 = scmp.eq.s32.totalorder %s14, 0
    %p118 = por %p116, %p117
    %p119 = scmp.ne.s32.totalorder %s111, %s113
    %p120 = scmp.eq.s32.totalorder %s19, 1
    %p121 = por %p119, %p120
    %p122 = scmp.ne.s32.totalorder %s113, %s114
    %p123 = scmp.eq.s32.totalorder %s19, 0
    %p124 = por %p122, %p123
    %p125 = scmp.ne.s32.totalorder %s113, %s114
    %p126 = scmp.eq.s32.totalorder %s20, 1
    %p127 = por %p125, %p126
    %p129 = scmp.ne.s32.totalorder %s114, %s128
    %p130 = scmp.eq.s32.totalorder %s20, 0
    %p131 = por %p129, %p130
    %s133 = sadd.s32 %s132, 1
    %p136 = scmp.eq.s32.totalorder %s14, 1
    %p137 = scmp.ne.s32.totalorder %s132, %s134
    %p138 = scmp.eq.s32.totalorder %s14, 0
    %p139 = por %p137, %p138
    %p140 = scmp.ne.s32.totalorder %s132, %s134
    %p141 = scmp.eq.s32.totalorder %s19, 1
    %p142 = por %p140, %p141
    %p143 = scmp.ne.s32.totalorder %s134, %s135
    %p144 = scmp.eq.s32.totalorder %s19, 0
    %p145 = por %p143, %p144
    %p146 = scmp.ne.s32.totalorder %s134, %s135
    %p147 = scmp.eq.s32.totalorder %s20, 1
    %p148 = por %p146, %p147
    %p150 = scmp.ne.s32.totalorder %s135, %s149
    %p151 = scmp.eq.s32.totalorder %s20, 0
    %p152 = por %p150, %p151
    %s154 = sadd.s32 %s153, 1
    %p157 = scmp.eq.s32.totalorder %s14, 1
    %p158 = scmp.ne.s32.totalorder %s153, %s155
    %p159 = scmp.eq.s32.totalorder %s14, 0
    %p160 = por %p158, %p159
    %p161 = scmp.ne.s32.totalorder %s153, %s155
    %p162 = scmp.eq.s32.totalorder %s19, 1
    %p163 = por %p161, %p162
    %p164 = scmp.ne.s32.totalorder %s155, %s156
    %p165 = scmp.eq.s32.totalorder %s19, 0
    %p166 = por %p164, %p165
    %p167 = scmp.ne.s32.totalorder %s155, %s156
    %p168 = scmp.eq.s32.totalorder %s20, 1
    %p169 = por %p167, %p168
    %p171 = scmp.ne.s32.totalorder %s156, %s170
    %p172 = scmp.eq.s32.totalorder %s20, 0
    %p173 = por %p171, %p172
    %s175 = sadd.s32 %s174, 1
    %p178 = scmp.eq.s32.totalorder %s14, 1
    %p179 = scmp.ne.s32.totalorder %s174, %s176
    %p180 = scmp.eq.s32.totalorder %s14, 0
    %p181 = por %p179, %p180
    %p182 = scmp.ne.s32.totalorder %s174, %s176
    %p183 = scmp.eq.s32.totalorder %s19, 1
    %p184 = por %p182, %p183
    %p185 = scmp.ne.s32.totalorder %s176, %s177
    %p186 = scmp.eq.s32.totalorder %s19, 0
    %p187 = por %p185, %p186
    %p188 = scmp.ne.s32.totalorder %s176, %s177
    %p189 = scmp.eq.s32.totalorder %s20, 1
    %p190 = por %p188, %p189
    %p192 = scmp.ne.s32.totalorder %s177, %s191
    %p193 = scmp.eq.s32.totalorder %s20, 0
    %p194 = por %p192, %p193
    %s195 = ssub.s32 %s21, %s33
    %s196 = ssub.s32 %s22, %s29
    %s197 = sor.u32 %s195, %s196
    %p198 = scmp.eq.s32.totalorder %s197, 0
    %s200 = sadd.s32 %s199, 1
    %s201 = scalar_select %p198, %s199, %s200
    %p204 = pneg %p198
    %p205 = scmp.eq.s32.totalorder %s14, 1
    %p206 = por %p204, %p205
    %p207 = scmp.ne.s32.totalorder %s199, %s202
    %p208 = scmp.eq.s32.totalorder %s14, 0
    %p209 = por %p207, %p208
    %p210 = scmp.ne.s32.totalorder %s199, %s202
    %p211 = scmp.eq.s32.totalorder %s19, 1
    %p212 = por %p210, %p211
    %p213 = scmp.ne.s32.totalorder %s202, %s203
    %p214 = scmp.eq.s32.totalorder %s19, 0
    %p215 = por %p213, %p214
    %p216 = scmp.ne.s32.totalorder %s202, %s203
    %p217 = scmp.eq.s32.totalorder %s20, 1
    %p218 = por %p216, %p217
    %p220 = scmp.ne.s32.totalorder %s203, %s219
    %p221 = scmp.eq.s32.totalorder %s20, 0
    %p222 = por %p220, %p221
    %p223 = scmp.le.s32.totalorder 1, %s14
    %p224 = scmp.lt.s32.totalorder %s14, 3
    %p225 = pnand %p223, %p224
    %p226 = pneg %p225
    // Predicated region
    $region9: #{tpu_custom_call.1} parent=5 // pred_check
      _
    $region10: #{tpu_custom_call.1} parent=5 // pred_check_branch
      %228 = sbr.rel (%p225) target = $region12
    $region11: #{tpu_custom_call.1} parent=5 // pred_region
      %s229 = ssub.s32 %s14, 1
      // Predicated region
      $region13: #{tpu_custom_call.1} parent=11 // pred_check
        %p230 = pneg %p103
      $region14: #{tpu_custom_call.1} parent=11 // pred_check_branch
        %232 = sbr.rel (%p230) target = $region16
      $region15: #{tpu_custom_call.1} parent=11 // pred_region
        _
      $region16: #{tpu_custom_call.1} parent=11 // pred_fallthru
        _
      // Predicated region
      $region17: #{tpu_custom_call.1} parent=11 // pred_check
        %p233 = pneg %p124
      $region18: #{tpu_custom_call.1} parent=11 // pred_check_branch
        %235 = sbr.rel (%p233) target = $region20
      $region19: #{tpu_custom_call.1} parent=11 // pred_region
        _
      $region20: #{tpu_custom_call.1} parent=11 // pred_fallthru
        _
      // Predicated region
      $region21: #{tpu_custom_call.1} parent=11 // pred_check
        %p236 = pneg %p145
      $region22: #{tpu_custom_call.1} parent=11 // pred_check_branch
        %238 = sbr.rel (%p236) target = $region24
      $region23: #{tpu_custom_call.1} parent=11 // pred_region
        _
      $region24: #{tpu_custom_call.1} parent=11 // pred_fallthru
        _
      // Predicated region
      $region25: #{tpu_custom_call.1} parent=11 // pred_check
        %p239 = pneg %p166
      $region26: #{tpu_custom_call.1} parent=11 // pred_check_branch
        %241 = sbr.rel (%p239) target = $region28
      $region27: #{tpu_custom_call.1} parent=11 // pred_region
        _
      $region28: #{tpu_custom_call.1} parent=11 // pred_fallthru
        _
      // Predicated region
      $region29: #{tpu_custom_call.1} parent=11 // pred_check
        %p242 = pneg %p187
      $region30: #{tpu_custom_call.1} parent=11 // pred_check_branch
        %244 = sbr.rel (%p242) target = $region32
      $region31: #{tpu_custom_call.1} parent=11 // pred_region
        _
      $region32: #{tpu_custom_call.1} parent=11 // pred_fallthru
        _
    $region12: #{tpu_custom_call.1} parent=5 // pred_fallthru
      _
    %p245 = scmp.lt.s32.totalorder %s14, 2
    // Predicated region
    $region33: #{tpu_custom_call.1} parent=5 // pred_check
      %p246 = pneg %p245
    $region34: #{tpu_custom_call.1} parent=5 // pred_check_branch
      %248 = sbr.rel (%p246) target = $region36
    $region35: #{tpu_custom_call.1} parent=5 // pred_region
      // Predicated region
      $region37: #{tpu_custom_call.1} parent=35 // pred_check
        %p249 = pneg %p48
      $region38: #{tpu_custom_call.1} parent=35 // pred_check_branch
        %251 = sbr.rel (%p249) target = $region40
      $region39: #{tpu_custom_call.1} parent=35 // pred_region
        %s252 = smul.u32 2, %s22
        %p253 = scmp.lt.s32.totalorder %s21, 1
        %s254 = scalar_select %p253, %s21, 1
        %p255 = scmp.lt.s32.totalorder %s252, 1
        %s256 = scalar_select %p255, %s252, 1
        %s257 = smul.addr %s254, 2
        %s258 = sadd.s32 %s256, %s257
        %s259 = smul.addr %s258, 4
        %s260 = scalar_lea.vmem %s0, %s259
        %s261 = smul.u32 2, %s22
      $region40: #{tpu_custom_call.1} parent=35 // pred_fallthru
        _
      // Predicated region
      $region41: #{tpu_custom_call.1} parent=35 // pred_check
        %p262 = pneg %p76
      $region42: #{tpu_custom_call.1} parent=35 // pred_check_branch
        %264 = sbr.rel (%p262) target = $region44
      $region43: #{tpu_custom_call.1} parent=35 // pred_region
        %s265 = smul.u32 2, %s22
        %p266 = scmp.lt.s32.totalorder %s21, 1
        %s267 = scalar_select %p266, %s21, 1
        %p268 = scmp.lt.s32.totalorder %s265, 1
        %s269 = scalar_select %p268, %s265, 1
        %s270 = smul.addr %s267, 2
        %s271 = sadd.s32 %s269, %s270
        %s272 = smul.addr %s271, 8
        %s273 = scalar_lea.vmem %s1, %s272
        %s274 = smul.u32 2, %s22
      $region44: #{tpu_custom_call.1} parent=35 // pred_fallthru
        _
    $region36: #{tpu_custom_call.1} parent=5 // pred_fallthru
      _
    %p275 = scmp.le.s32.totalorder 1, %s14
    %p276 = scmp.lt.s32.totalorder %s14, 3
    %p277 = pnand %p275, %p276
    %p278 = pneg %p277
    // Predicated region
    $region45: #{tpu_custom_call.1} parent=5 // pred_check
      _
    $region46: #{tpu_custom_call.1} parent=5 // pred_check_branch
      %280 = sbr.rel (%p277) target = $region48
    $region47: #{tpu_custom_call.1} parent=5 // pred_region
      %s281 = ssub.s32 %s14, 1
      %s282 = smul.u32 2, %s24
      %p283 = scmp.lt.s32.totalorder %s23, 1
      %s284 = scalar_select %p283, %s23, 1
      %p285 = scmp.lt.s32.totalorder %s282, 1
      %s286 = scalar_select %p285, %s282, 1
      %s287 = smul.addr %s284, 2
      %s288 = sadd.s32 %s286, %s287
      %s289 = smul.addr %s288, 4
      %s290 = scalar_lea.vmem %s0, %s289
      %p291 = pneg %p54
      %p292 = pneg %p51
      %s293 = smul.u32 2, %s24
      %p294 = scmp.lt.s32.totalorder %s23, 1
      %s295 = scalar_select %p294, %s23, 1
      %p296 = scmp.lt.s32.totalorder %s293, 1
      %s297 = scalar_select %p296, %s293, 1
      %s298 = smul.addr %s295, 2
      %s299 = sadd.s32 %s297, %s298
      %s300 = smul.addr %s299, 8
      %s301 = scalar_lea.vmem %s1, %s300
      %p302 = pneg %p82
      %p303 = pneg %p79
      %p304 = pneg %p103
      %p305 = pneg %p100
      %p306 = pneg %p124
      %p307 = pneg %p121
      %p308 = pneg %p145
      %p309 = pneg %p142
      %p310 = pneg %p166
      %p311 = pneg %p163
      %p312 = pneg %p187
      %p313 = pneg %p184
      %p314 = pneg %p215
      %p315 = pneg %p212
      %s316 = smul.u32 2, %s24
      %p317 = scmp.lt.s32.totalorder %s23, 1
      %s318 = scalar_select %p317, %s23, 1
      %p319 = scmp.lt.s32.totalorder %s316, 1
      %s320 = scalar_select %p319, %s316, 1
      %s321 = smul.addr %s318, 2
      %s322 = sadd.s32 %s320, %s321
      %s323 = smul.addr %s322, 8
      %s324 = scalar_lea.vmem %s7, %s323
      %s325 = smul.u32 2, %s24
      %p326 = scmp.lt.s32.totalorder %s23, 1
      %s327 = scalar_select %p326, %s23, 1
      %p328 = scmp.lt.s32.totalorder %s325, 1
      %s329 = scalar_select %p328, %s325, 1
      %s330 = smul.addr %s327, 2
      %s331 = sadd.s32 %s329, %s330
      %s332 = smul.addr %s331, 4
      %s333 = scalar_lea.vmem %s0, %s332
      %s334 = smul.u32 2, %s24
      %s335 = smul.u32 2, %s24
      %p336 = scmp.lt.s32.totalorder %s23, 1
      %s337 = scalar_select %p336, %s23, 1
      %p338 = scmp.lt.s32.totalorder %s335, 1
      %s339 = scalar_select %p338, %s335, 1
      %s340 = smul.addr %s337, 2
      %s341 = sadd.s32 %s339, %s340
      %s342 = smul.addr %s341, 8
      %s343 = scalar_lea.vmem %s1, %s342
      %s344 = smul.u32 2, %s24
      %s345 = smul.u32 2, %s24
      %p346 = scmp.lt.s32.totalorder %s23, 1
      %s347 = scalar_select %p346, %s23, 1
      %p348 = scmp.lt.s32.totalorder %s345, 1
      %s349 = scalar_select %p348, %s345, 1
      %s350 = smul.addr %s347, 2
      %s351 = sadd.s32 %s349, %s350
      %s352 = smul.addr %s351, 8
      %s353 = scalar_lea.vmem %s7, %s352
      %s354 = smul.u32 2, %s24
      %v355 = vld [vmem:[%s333] sm:$0xff]
      %v356 = vld [vmem:[%s343] sm:$0x3f]
      %v357 = vld [vmem:[%s343 + $0x8] sm:$0x3f]
      %v358 = vld [vmem:[%s2] sm:$0xff]
      %v359 = vld [vmem:[%s3] sm:$0xff]
      %vm360 = vcmask 48128
      %v362 = vsel %vm360, %v359, 0
      %vm364 = vcmask 1045504
      %v366 = vsel %vm364, %v356, 0
      %v369 = vsel %vm364, %v357, 0
      %371 = vmatpush.msra.mxu0 0.0
      %372 = vmatpush.msra.mxu0 0.0
      %373 = vmatpush.msra.mxu0 0.0
      %374 = vmatpush.msra.mxu0 0.0
      %375 = vmatpush.msra.mxu0 0.0
      %376 = vmatpush.msra.mxu0 0.0
      %377 = vmatpush.msra.mxu0 0.0
      %378 = vmatpush.msra.mxu0 0.0
      %379 = vmatpush.msra.mxu0 0.0
      %380 = vmatpush.msra.mxu0 0.0
      %381 = vmatpush.msra.mxu0 0.0
      %382 = vmatpush.msra.mxu0 0.0
      %383 = vmatpush.msra.mxu0 0.0
      %384 = vmatpush.msra.mxu0 0.0
      %385 = vmatpush.msra.mxu0 0.0
      %386 = vmatpush.msra.mxu0 %v366
      %387 = vmatmul.f32.gmra.mxu0 %v362
      %v388 = vpop.f32.mrf.mxu0
      %v389 = vadd.f32 0.0, %v388
      %390 = vdwg.mxu0
      %391 = vmatpush.msra.mxu0 0.0
      %392 = vmatpush.msra.mxu0 0.0
      %393 = vmatpush.msra.mxu0 0.0
      %394 = vmatpush.msra.mxu0 0.0
      %395 = vmatpush.msra.mxu0 0.0
      %396 = vmatpush.msra.mxu0 0.0
      %397 = vmatpush.msra.mxu0 0.0
      %398 = vmatpush.msra.mxu0 0.0
      %399 = vmatpush.msra.mxu0 0.0
      %400 = vmatpush.msra.mxu0 0.0
      %401 = vmatpush.msra.mxu0 0.0
      %402 = vmatpush.msra.mxu0 0.0
      %403 = vmatpush.msra.mxu0 0.0
      %404 = vmatpush.msra.mxu0 0.0
      %405 = vmatpush.msra.mxu0 0.0
      %406 = vmatpush.msra.mxu0 %v369
      %407 = vmatmul.f32.gmra.mxu0 %v362
      %v408 = vpop.f32.mrf.mxu0
      %v409 = vadd.f32 0.0, %v408
      %410 = vdwg.mxu0
      %412 = vst [vmem:[#allocation1] ss:$2 sm:$0xff] %v355
      %v413 = vld.sshfl [vmem:[#allocation1] sm:$0xff pattern:$0x75316420]
      %v414 = vld.sshfl [vmem:[#allocation1 + $0x8] sm:$0xff pattern:$0x75316420]
      %vm415 = vcmask 31744
      %v417 = vsel %vm415, %v358, 0
      %vm419 = vcmask 1043456
      %v420 = vsel %vm419, %v413, 0
      %v422 = vsel %vm419, %v414, 0
      %424 = vmatpush.msra.mxu0 0.0
      %425 = vmatpush.msra.mxu0 0.0
      %426 = vmatpush.msra.mxu0 0.0
      %427 = vmatpush.msra.mxu0 0.0
      %428 = vmatpush.msra.mxu0 0.0
      %429 = vmatpush.msra.mxu0 0.0
      %430 = vmatpush.msra.mxu0 0.0
      %431 = vmatpush.msra.mxu0 0.0
      %432 = vmatpush.msra.mxu0 0.0
      %433 = vmatpush.msra.mxu0 0.0
      %434 = vmatpush.msra.mxu0 0.0
      %435 = vmatpush.msra.mxu0 0.0
      %436 = vmatpush.msra.mxu0 0.0
      %437 = vmatpush.msra.mxu0 0.0
      %438 = vmatpush.msra.mxu0 0.0
      %439 = vmatpush.msra.mxu0 %v420
      %440 = vmatmul.f32.gmra.mxu0 %v417
      %v441 = vpop.f32.mrf.mxu0
      %v442 = vadd.f32 %v389, %v441
      %443 = vdwg.mxu0
      %444 = vmatpush.msra.mxu0 0.0
      %445 = vmatpush.msra.mxu0 0.0
      %446 = vmatpush.msra.mxu0 0.0
      %447 = vmatpush.msra.mxu0 0.0
      %448 = vmatpush.msra.mxu0 0.0
      %449 = vmatpush.msra.mxu0 0.0
      %450 = vmatpush.msra.mxu0 0.0
      %451 = vmatpush.msra.mxu0 0.0
      %452 = vmatpush.msra.mxu0 0.0
      %453 = vmatpush.msra.mxu0 0.0
      %454 = vmatpush.msra.mxu0 0.0
      %455 = vmatpush.msra.mxu0 0.0
      %456 = vmatpush.msra.mxu0 0.0
      %457 = vmatpush.msra.mxu0 0.0
      %458 = vmatpush.msra.mxu0 0.0
      %459 = vmatpush.msra.mxu0 %v422
      %460 = vmatmul.f32.gmra.mxu0 %v417
      %v461 = vpop.f32.mrf.mxu0
      %v462 = vadd.f32 %v409, %v461
      %463 = vdwg.mxu0
      %v464 = vld [vmem:[%s4] sm:$0xff]
      %466 = vset.pattern.permute.xlu0 0
      %467 = vperm.xlu0 %466, %v464
      %v468 = vpop.permute.xlu0 %467
      %v470 = vadd.f32 %v442, %v468
      %v471 = vadd.f32 %v462, %v468
      %v472 = vmax.f32 %v470, 0.0
      %v473 = vmax.f32 %v471, 0.0
      %v474 = vld [vmem:[%s5] sm:$0xff]
      %476 = vset.pattern.permute.xlu0 0
      %477 = vperm.xlu0 %476, %v474
      %v478 = vpop.permute.xlu0 %477
      %v480 = vmul.f32 %v472, %v478
      %v481 = vmul.f32 %v473, %v478
      %v482 = vrot.slane %v480, 4
      %v483 = vadd.f32 %v480, %v482
      %v484 = vrot.slane %v483, 2
      %v485 = vadd.f32 %v483, %v484
      %v486 = vrot.slane %v485, 1
      %v487 = vadd.f32 %v485, %v486
      %v488 = vrot.slane %v481, 4
      %v489 = vadd.f32 %v481, %v488
      %v490 = vrot.slane %v489, 2
      %v491 = vadd.f32 %v489, %v490
      %v492 = vrot.slane %v491, 1
      %v493 = vadd.f32 %v491, %v492
      %s494 = sld [smem:[#allocation2]]
      %v495 = vstv %s494
      %v496 = vadd.f32 %v487, %v495
      %v497 = vadd.f32 %v493, %v495
      %v498 = vxor.u32 %v496, 2147483648
      %v499 = vxor.u32 %v497, 2147483648
      %v500 = vmul.f32 %v498, 1.442695
      %v501 = vpow.pop %v500
      %v502 = vmul.f32 %v499, 1.442695
      %v503 = vpow.pop %v502
      %v504 = vadd.f32 %v501, 1.0
      %v505 = vadd.f32 %v503, 1.0
      %v506 = vrcp.pop %v504
      %v507 = vmul.f32 %v504, %v506
      %v508 = vsub.f32 1.0, %v507
      %v509 = vmul.f32 %v506, %v508
      %v510 = vadd.f32 %v506, %v509
      %vm511 = vweird.f32 %v504
      %vm512 = vweird.f32 %v506
      %vm513 = vmor %vm511, %vm512
      %v514 = vsel %vm513, %v506, %v510
      %v515 = vand.u32 2147483647, %v504
      %vm516 = vcmp.eq.f32.partialorder %v515, 8.507059e+37
      %v517 = vand.u32 %v504, 2147483648
      %v518 = vor.u32 1.1754944e-38, %v517
      %v519 = vsel %vm516, %v518, %v514
      %v520 = vmul.f32 1.0, %v519
      %v521 = vrcp.pop %v505
      %v522 = vmul.f32 %v505, %v521
      %v523 = vsub.f32 1.0, %v522
      %v524 = vmul.f32 %v521, %v523
      %v525 = vadd.f32 %v521, %v524
      %vm526 = vweird.f32 %v505
      %vm527 = vweird.f32 %v521
      %vm528 = vmor %vm526, %vm527
      %v529 = vsel %vm528, %v521, %v525
      %v530 = vand.u32 2147483647, %v505
      %vm531 = vcmp.eq.f32.partialorder %v530, 8.507059e+37
      %v532 = vand.u32 %v505, 2147483648
      %v533 = vor.u32 1.1754944e-38, %v532
      %v534 = vsel %vm531, %v533, %v529
      %v535 = vmul.f32 1.0, %v534
      %v536 = vmul.f32 %v356, %v520
      %v537 = vmul.f32 %v357, %v535
      %538 = vst [vmem:[%s353] sm:$0x3f] %v536
      %539 = vst [vmem:[%s353 + $0x8] sm:$0x3f] %v537
      %s540 = smul.u32 2, %s24
      %p541 = scmp.lt.s32.totalorder %s23, 1
      %s542 = scalar_select %p541, %s23, 1
      %p543 = scmp.lt.s32.totalorder %s540, 1
      %s544 = scalar_select %p543, %s540, 1
      %s545 = smul.addr %s542, 2
      %s546 = sadd.s32 %s544, %s545
      %s547 = smul.addr %s546, 8
      %s548 = scalar_lea.vmem %s7, %s547
      // Predicated region
      $region49: #{tpu_custom_call.1} parent=47 // pred_check
        %p549 = pneg %p212
      $region50: #{tpu_custom_call.1} parent=47 // pred_check_branch
        %551 = sbr.rel (%p549) target = $region52
      $region51: #{tpu_custom_call.1} parent=47 // pred_region
        %s552 = smul.u32 2, %s24
      $region52: #{tpu_custom_call.1} parent=47 // pred_fallthru
        _
    $region48: #{tpu_custom_call.1} parent=5 // pred_fallthru
      _
    %p553 = scmp.le.s32.totalorder 2, %s14
    // Predicated region
    $region53: #{tpu_custom_call.1} parent=5 // pred_check
      %p554 = pneg %p553
    $region54: #{tpu_custom_call.1} parent=5 // pred_check_branch
      %556 = sbr.rel (%p554) target = $region56
    $region55: #{tpu_custom_call.1} parent=5 // pred_region
      %s557 = ssub.s32 %s14, 2
      // Predicated region
      $region57: #{tpu_custom_call.1} parent=55 // pred_check
        %p558 = pneg %p218
      $region58: #{tpu_custom_call.1} parent=55 // pred_check_branch
        %560 = sbr.rel (%p558) target = $region60
      $region59: #{tpu_custom_call.1} parent=55 // pred_region
        %s561 = smul.u32 2, %s26
        %p562 = scmp.lt.s32.totalorder %s25, 1
        %s563 = scalar_select %p562, %s25, 1
        %p564 = scmp.lt.s32.totalorder %s561, 1
        %s565 = scalar_select %p564, %s561, 1
        %s566 = smul.addr %s563, 2
        %s567 = sadd.s32 %s565, %s566
        %s568 = smul.addr %s567, 8
        %s569 = scalar_lea.vmem %s7, %s568
      $region60: #{tpu_custom_call.1} parent=55 // pred_fallthru
        _
    $region56: #{tpu_custom_call.1} parent=5 // pred_fallthru
      _
  $region6: #{tpu_custom_call.1} parent=0 // loop_footer
    %s18 = sadd.s32 1, %s14
  $region7: #{tpu_custom_call.1} parent=0 // loop_footer_branch
    %13 = sbr.rel target = $region3
  $region8: #{tpu_custom_call.1} parent=0 // loop_exit
    _

</llo_original>
